<compile_context>
chip_gen: v5e
topology: v5e:2x2
jax: 0.10.0
libtpu: 0.0.40
codegen_flags: <defaults>
</compile_context>

<pallas_src>
import functools

import jax
import jax.numpy as jnp
from jax import lax
from jax.experimental import pallas as pl
from jax.experimental.pallas import tpu as pltpu

NEG_INF = -1e30  # finite "minus infinity": keeps exp()/max() NaN-free in f32


def _simclr_lse_kernel(zq_ref, zk_ref, invr_ref, invc_ref, cbias_ref,
                       out_ref, m_sc, l_sc, *, n_valid):
    """One (Tq, Tk) tile of the streamed, diagonal-masked log-sum-exp."""
    tq = zq_ref.shape[0]
    tk = zk_ref.shape[0]
    qi = pl.program_id(0)
    ki = pl.program_id(1)

    @pl.when(ki == 0)
    def _init():
        m_sc[...] = jnp.full(m_sc.shape, NEG_INF, dtype=jnp.float32)
        l_sc[...] = jnp.zeros_like(l_sc)

    # (Tq, Tk) scaled cosine scores: MXU contraction over D (bf16 inputs, f32
    # accumulation, no HBM-side transpose of the streamed operand), then the
    # cosine normalisation and 1/tau applied as two VPU multiplies against
    # precomputed per-row / per-column inverse norms (no N^2 divides).
    dots = lax.dot_general(
        zq_ref[...], zk_ref[...],
        dimension_numbers=(((1,), (1,)), ((), ())),
        preferred_element_type=jnp.float32)                        # (Tq, Tk) f32
    s = dots * invr_ref[...] * invc_ref[...]                       # invr has 1/tau folded in

    # Masking:  i == j (diagonal) via one compare+select on broadcasted iotas;
    # padded columns via a precomputed additive bias (0 / -1e30) vector.
    # Masked entries become <= -1e30, so exp() below gives exactly 0 and no
    # further selects are needed on the LSE path.
    row_ids = qi * tq + lax.broadcasted_iota(jnp.int32, (tq, 1), 0)
    col_ids = ki * tk + lax.broadcasted_iota(jnp.int32, (1, tk), 1)
    s = jnp.where(row_ids == col_ids, NEG_INF, s) + cbias_ref[...]

    # Online (flash-style) log-sum-exp over j != i.
    m_new = jnp.maximum(m_sc[...], jnp.max(s, axis=-1, keepdims=True))
    l_sc[...] = (jnp.exp(m_sc[...] - m_new) * l_sc[...]
                 + jnp.sum(jnp.exp(s - m_new), axis=-1, keepdims=True))
    m_sc[...] = m_new

    @pl.when(ki == pl.num_programs(1) - 1)
    def _finalize():
        lse = m_sc[...] + jnp.log(l_sc[...])
        out_ref[...] = jnp.where(row_ids < n_valid, lse, 0.0)


def simclr_forward(lst_z, tau=0.01, *, eps=1e-8,
                   block_q=512, block_k=512, matmul_dtype=jnp.bfloat16,
                   vmem_limit_bytes=64 * 1024 * 1024):
    """Pallas implementation of SimCLR.forward(lst_z) -> scalar loss."""
    if block_q % 8 != 0 or block_k % 128 != 0:
        raise ValueError("block_q must be a multiple of 8, block_k of 128")
    if max(block_q, block_k) % min(block_q, block_k) != 0:
        raise ValueError("one of block_q/block_k must divide the other")

    k = len(lst_z)
    z = jnp.concatenate([jnp.asarray(zi, jnp.float32) for zi in lst_z], axis=0)
    N, D = z.shape
    n = N // k                      # module semantics assume N == k * n
    inv_tau = float(1.0 / tau)

    # Quantise once for the MXU; inverse norms are taken from the quantised
    # values so the in-kernel cosine matches cosine_similarity of what the
    # MXU actually sees.  (Per-factor eps instead of eps on the product; the
    # two only differ for degenerate near-zero rows.)
    z_c = z.astype(matmul_dtype)
    z_f = z_c.astype(jnp.float32)
    sq_norm = jnp.sum(z_f * z_f, axis=-1, keepdims=True)                 # (N, 1)
    inv_norm = 1.0 / jnp.maximum(jnp.sqrt(sq_norm), eps)                 # (N, 1)

    # Positive-pair term, hoisted out of the N^2 kernel loop (O(N*D) XLA ops):
    #   sum_{i != j, i%n == j%n} s_ij
    #     = 1/tau * sum_i [ <z_i, sum_t z_{i%n + t*n}/||.||> / ||z_i||  -  cos_ii ]
    zn = z_f * inv_norm                                                  # (N, D)
    w = jnp.tile(zn.reshape(k, n, D).sum(axis=0), (k, 1))                # row i -> sum over views of sample i%n
    pos_incl_diag = jnp.sum(z_f * w, axis=-1) * inv_norm[:, 0]           # (N,)
    cos_ii = sq_norm[:, 0] * inv_norm[:, 0] ** 2                         # ~= 1 (exactly the kernel's diagonal value)
    pos_total = inv_tau * jnp.sum(pos_incl_diag - cos_ii)

    # --- padding / tiling (last-two-dims aligned to (8, 128)) ---
    def _rup(x, m):
        return (x + m - 1) // m * m

    d_pad = _rup(D, 128)
    n_pad8 = _rup(N, 8)
    blk = max(block_q, block_k)
    if n_pad8 >= blk:
        tq, tk = block_q, block_k
        n_pad = _rup(N, blk)
    else:                       # small problem: one tile per axis
        tq = tk = n_pad8
        n_pad = n_pad8
    gq, gk = n_pad // tq, n_pad // tk
    # Per-step VMEM: (tq + 2*tk) * d_pad bf16 buffers + a few (tq, tk) f32
    # temporaries -- comfortably inside the raised scoped-VMEM limit for the
    # default 512x512 tiles even at large D.

    z_p = jnp.pad(z_c, ((0, n_pad - N), (0, d_pad - D)))                 # (Np, Dp) bf16
    inv_r = jnp.pad(inv_norm * inv_tau, ((0, n_pad - N), (0, 0)))        # (Np, 1), 1/tau folded in
    inv_c = jnp.pad(inv_norm, ((0, n_pad - N), (0, 0))).reshape(1, n_pad)
    cbias = jnp.where(jnp.arange(n_pad) < N, 0.0, NEG_INF)
    cbias = cbias.astype(jnp.float32).reshape(1, n_pad)                  # padded-column bias

    kernel = functools.partial(_simclr_lse_kernel, n_valid=N)

    lse = pl.pallas_call(
        kernel,
        out_shape=jax.ShapeDtypeStruct((n_pad, 1), jnp.float32),
        grid_spec=pltpu.PrefetchScalarGridSpec(
            num_scalar_prefetch=0,
            grid=(gq, gk),                                   # reduction axis last
            in_specs=[
                pl.BlockSpec((tq, d_pad), lambda qi, ki: (qi, 0)),   # resident rows
                pl.BlockSpec((tk, d_pad), lambda qi, ki: (ki, 0)),   # streamed cols
                pl.BlockSpec((tq, 1), lambda qi, ki: (qi, 0)),       # 1/(tau*||z_i||)
                pl.BlockSpec((1, tk), lambda qi, ki: (0, ki)),       # 1/||z_j||
                pl.BlockSpec((1, tk), lambda qi, ki: (0, ki)),       # padded-col bias
            ],
            out_specs=pl.BlockSpec((tq, 1), lambda qi, ki: (qi, 0)),
            scratch_shapes=[pltpu.VMEM((tq, 1), jnp.float32)] * 2,   # m, l
        ),
        compiler_params=pltpu.CompilerParams(
            dimension_semantics=("parallel", "arbitrary"),
            vmem_limit_bytes=vmem_limit_bytes),
    )(z_p, z_p, inv_r, inv_c, cbias)

    # Tiny final combine (padded rows contributed 0 to the lse sum).
    return ((k - 1) * jnp.sum(lse) - pos_total) / float(n * (k * k - k))


def simclr_reference(lst_z, tau=0.01):
    """Pure-JAX (f32, un-tiled) reference of the PyTorch forward."""
    k = len(lst_z)
    z = jnp.concatenate([jnp.asarray(zi, jnp.float32) for zi in lst_z], axis=0)
    N, _ = z.shape
    n = N // k
    norm = jnp.linalg.norm(z, axis=-1, keepdims=True)
    cos = (z @ z.T) / jnp.maximum(norm * norm.T, 1e-8)
    s = cos / tau
    eye = jnp.eye(N, dtype=jnp.float32)
    offdiag = 1.0 - eye
    s_max = jnp.max(s - 1.0e12 * eye, axis=-1, keepdims=True)
    lse = s_max + jnp.log(jnp.sum(jnp.exp(s - s_max) * offdiag,
                                  axis=-1, keepdims=True))
    L = (lse - s) * offdiag
    sel = jnp.tile(jnp.eye(n, dtype=jnp.float32), (k, k))
    return jnp.sum(L * sel) / (n * (k * k - k))


def _check(lst_z, loss, tau):
    # Tight check against the module semantics on the exact bf16-quantised
    # inputs the MXU saw; loose check against the original f32 inputs (the
    # remaining gap is only bf16 input quantisation amplified by 1/tau).
    lst_z_q = [jnp.asarray(zi, jnp.float32).astype(jnp.bfloat16).astype(jnp.float32)
               for zi in lst_z]
    ref_q = simclr_reference(lst_z_q, tau=tau)
    ref_f = simclr_reference(lst_z, tau=tau)
    assert bool(jnp.isfinite(loss)), loss
    assert jnp.allclose(loss, ref_q, rtol=1e-3, atol=1e-3), (loss, ref_q)
    assert jnp.allclose(loss, ref_f, rtol=1e-1, atol=1e-1), (loss, ref_f)


if __name__ == "__main__":
    tau = 0.01
    keys = jax.random.split(jax.random.PRNGKey(0), 6)

    # Case 1: tiny single-tile problem (k=2 views of an (8, 32) feature batch).
    lst_z = [jax.random.normal(keys[i], (8, 32), jnp.float32) for i in range(2)]
    loss = jax.block_until_ready(simclr_forward(lst_z, tau=tau))
    _check(lst_z, loss, tau)

    # Case 2: streaming path with padded rows and columns -- grid (4, 2)
    # (N=200 -> N_pad=256, D=48 -> D_pad=128) using small test tiles.
    lst_z = [jax.random.normal(keys[2 + i], (100, 48), jnp.float32)
             for i in range(2)]
    loss = jax.block_until_ready(
        simclr_forward(lst_z, tau=tau, block_q=64, block_k=128))
    _check(lst_z, loss, tau)

    # Case 3: default 512x512 tiles -- grid (2, 2) with padded row and column
    # tiles (N=640 -> N_pad=1024, D=192 -> D_pad=256).
    lst_z = [jax.random.normal(keys[4 + i], (320, 192), jnp.float32)
             for i in range(2)]
    loss = jax.block_until_ready(simclr_forward(lst_z, tau=tau))
    _check(lst_z, loss, tau)

    print("KERNEL_OK")
</pallas_src>

<mosaic_0001>
module attributes {stable_mosaic.version = 11 : i64} {
  func.func @_simclr_lse_kernel(%arg0: i32, %arg1: i32, %arg2: memref<16x128xbf16, #tpu.memory_space<vmem>>, %arg3: memref<16x128xbf16, #tpu.memory_space<vmem>>, %arg4: memref<16x1xf32, #tpu.memory_space<vmem>>, %arg5: memref<1x16xf32, #tpu.memory_space<vmem>>, %arg6: memref<1x16xf32, #tpu.memory_space<vmem>>, %arg7: memref<16x1xf32, #tpu.memory_space<vmem>>, %arg8: memref<16x1xf32, #tpu.memory_space<vmem>>, %arg9: memref<16x1xf32, #tpu.memory_space<vmem>>) attributes {dimension_semantics = [#tpu.dimension_semantics<parallel>, #tpu.dimension_semantics<arbitrary>], iteration_bounds = array<i64: 1, 1>, scalar_prefetch = 0 : i64, scratch_operands = 2 : i64, tpu.core_type = #tpu.core_type<tc>, window_params = [{transform_indices = @transform_0, window_bounds = array<i64: 16, 128>}, {transform_indices = @transform_1, window_bounds = array<i64: 16, 128>}, {transform_indices = @transform_2, window_bounds = array<i64: 16, 1>}, {transform_indices = @transform_3, window_bounds = array<i64: 1, 16>}, {transform_indices = @transform_4, window_bounds = array<i64: 1, 16>}, {transform_indices = @transform_5, window_bounds = array<i64: 16, 1>}]} {
    %c0_i32 = arith.constant 0 : i32
    %0 = arith.cmpi eq, %arg1, %c0_i32 : i32
    %1 = arith.extui %0 : i1 to i32
    %c0_i32_0 = arith.constant 0 : i32
    %2 = arith.cmpi ne, %1, %c0_i32_0 : i32
    scf.if %2 {
      %cst_26 = arith.constant -1.000000e+30 : f32
      %48 = vector.broadcast %cst_26 : f32 to vector<16x1xf32>
      %c0_27 = arith.constant 0 : index
      %c0_28 = arith.constant 0 : index
      %49 = vector.load %arg8[%c0_27, %c0_28] : memref<16x1xf32, #tpu.memory_space<vmem>>, vector<16x1xf32>
      tpu.vector_store %arg8[%c0_27, %c0_28], %48 {strides = array<i32>} : memref<16x1xf32, #tpu.memory_space<vmem>>, vector<16x1xf32>,
      %cst_29 = arith.constant 0.000000e+00 : f32
      %50 = vector.broadcast %cst_29 : f32 to vector<16x1xf32>
      %c0_30 = arith.constant 0 : index
      %c0_31 = arith.constant 0 : index
      %51 = vector.load %arg9[%c0_30, %c0_31] : memref<16x1xf32, #tpu.memory_space<vmem>>, vector<16x1xf32>
      tpu.vector_store %arg9[%c0_30, %c0_31], %50 {strides = array<i32>} : memref<16x1xf32, #tpu.memory_space<vmem>>, vector<16x1xf32>,
    } else {
    }
    %c0 = arith.constant 0 : index
    %c0_1 = arith.constant 0 : index
    %3 = vector.load %arg2[%c0, %c0_1] : memref<16x128xbf16, #tpu.memory_space<vmem>>, vector<16x128xbf16>
    %c0_2 = arith.constant 0 : index
    %c0_3 = arith.constant 0 : index
    %4 = vector.load %arg3[%c0_2, %c0_3] : memref<16x128xbf16, #tpu.memory_space<vmem>>, vector<16x128xbf16>
    %cst = arith.constant dense<0.000000e+00> : vector<16x16xf32>
    %5 = tpu.matmul %3, %4, %cst {dimension_numbers = #tpu.dot_dimension_numbers<[1], [1], [0], [0], [0, 0, 1, 0], [], []>} : vector<16x128xbf16>, vector<16x128xbf16>, vector<16x16xf32> -> vector<16x16xf32>
    %c0_4 = arith.constant 0 : index
    %c0_5 = arith.constant 0 : index
    %6 = vector.load %arg4[%c0_4, %c0_5] : memref<16x1xf32, #tpu.memory_space<vmem>>, vector<16x1xf32>
    %7 = vector.broadcast %6 : vector<16x1xf32> to vector<16x16xf32>
    %8 = arith.mulf %5, %7 : vector<16x16xf32>
    %c0_6 = arith.constant 0 : index
    %c0_7 = arith.constant 0 : index
    %9 = vector.load %arg5[%c0_6, %c0_7] : memref<1x16xf32, #tpu.memory_space<vmem>>, vector<1x16xf32>
    %10 = vector.broadcast %9 : vector<1x16xf32> to vector<16x16xf32>
    %11 = arith.mulf %8, %10 : vector<16x16xf32>
    %c16_i32 = arith.constant 16 : i32
    %12 = arith.muli %arg0, %c16_i32 : i32
    %13 = tpu.iota {dimensions = array<i32: 0>} : vector<16x1xi32>
    %14 = vector.broadcast %12 : i32 to vector<16x1xi32>
    %15 = arith.addi %14, %13 : vector<16x1xi32>
    %c16_i32_8 = arith.constant 16 : i32
    %16 = arith.muli %arg1, %c16_i32_8 : i32
    %17 = tpu.iota {dimensions = array<i32: 1>} : vector<1x16xi32>
    %18 = vector.broadcast %16 : i32 to vector<1x16xi32>
    %19 = arith.addi %18, %17 : vector<1x16xi32>
    %20 = vector.broadcast %15 : vector<16x1xi32> to vector<16x16xi32>
    %21 = vector.broadcast %19 : vector<1x16xi32> to vector<16x16xi32>
    %22 = arith.cmpi eq, %20, %21 : vector<16x16xi32>
    %cst_9 = arith.constant -1.000000e+30 : f32
    %23 = vector.broadcast %cst_9 : f32 to vector<16x16xf32>
    %24 = arith.select %22, %23, %11 : vector<16x16xi1>, vector<16x16xf32>
    %c0_10 = arith.constant 0 : index
    %c0_11 = arith.constant 0 : index
    %25 = vector.load %arg6[%c0_10, %c0_11] : memref<1x16xf32, #tpu.memory_space<vmem>>, vector<1x16xf32>
    %26 = vector.broadcast %25 : vector<1x16xf32> to vector<16x16xf32>
    %27 = arith.addf %24, %26 : vector<16x16xf32>
    %c0_12 = arith.constant 0 : index
    %c0_13 = arith.constant 0 : index
    %28 = vector.load %arg8[%c0_12, %c0_13] : memref<16x1xf32, #tpu.memory_space<vmem>>, vector<16x1xf32>
    %cst_14 = arith.constant dense<0xFF800000> : vector<16xf32>
    %29 = vector.multi_reduction <maximumf>, %27, %cst_14 [1] : vector<16x16xf32> to vector<16xf32>
    %30 = vector.shape_cast %29 : vector<16xf32> to vector<16x1xf32>
    %31 = arith.maximumf %28, %30 : vector<16x1xf32>
    %c0_15 = arith.constant 0 : index
    %c0_16 = arith.constant 0 : index
    %32 = vector.load %arg8[%c0_15, %c0_16] : memref<16x1xf32, #tpu.memory_space<vmem>>, vector<16x1xf32>
    %33 = arith.subf %32, %31 : vector<16x1xf32>
    %34 = math.exp %33 : vector<16x1xf32>
    %c0_17 = arith.constant 0 : index
    %c0_18 = arith.constant 0 : index
    %35 = vector.load %arg9[%c0_17, %c0_18] : memref<16x1xf32, #tpu.memory_space<vmem>>, vector<16x1xf32>
    %36 = arith.mulf %34, %35 : vector<16x1xf32>
    %37 = vector.broadcast %31 : vector<16x1xf32> to vector<16x16xf32>
    %38 = arith.subf %27, %37 : vector<16x16xf32>
    %39 = math.exp %38 : vector<16x16xf32>
    %cst_19 = arith.constant dense<0.000000e+00> : vector<16xf32>
    %40 = vector.multi_reduction <add>, %39, %cst_19 [1] : vector<16x16xf32> to vector<16xf32>
    %41 = vector.shape_cast %40 : vector<16xf32> to vector<16x1xf32>
    %42 = arith.addf %36, %41 : vector<16x1xf32>
    %c0_20 = arith.constant 0 : index
    %c0_21 = arith.constant 0 : index
    %43 = vector.load %arg9[%c0_20, %c0_21] : memref<16x1xf32, #tpu.memory_space<vmem>>, vector<16x1xf32>
    tpu.vector_store %arg9[%c0_20, %c0_21], %42 {strides = array<i32>} : memref<16x1xf32, #tpu.memory_space<vmem>>, vector<16x1xf32>,
    %c0_22 = arith.constant 0 : index
    %c0_23 = arith.constant 0 : index
    %44 = vector.load %arg8[%c0_22, %c0_23] : memref<16x1xf32, #tpu.memory_space<vmem>>, vector<16x1xf32>
    tpu.vector_store %arg8[%c0_22, %c0_23], %31 {strides = array<i32>} : memref<16x1xf32, #tpu.memory_space<vmem>>, vector<16x1xf32>,
    %c0_i32_24 = arith.constant 0 : i32
    %45 = arith.cmpi eq, %arg1, %c0_i32_24 : i32
    %46 = arith.extui %45 : i1 to i32
    %c0_i32_25 = arith.constant 0 : i32
    %47 = arith.cmpi ne, %46, %c0_i32_25 : i32
    scf.if %47 {
      %c0_26 = arith.constant 0 : index
      %c0_27 = arith.constant 0 : index
      %48 = vector.load %arg8[%c0_26, %c0_27] : memref<16x1xf32, #tpu.memory_space<vmem>>, vector<16x1xf32>
      %c0_28 = arith.constant 0 : index
      %c0_29 = arith.constant 0 : index
      %49 = vector.load %arg9[%c0_28, %c0_29] : memref<16x1xf32, #tpu.memory_space<vmem>>, vector<16x1xf32>
      %50 = math.log %49 : vector<16x1xf32>
      %51 = arith.addf %48, %50 : vector<16x1xf32>
      %c16_i32_30 = arith.constant 16 : i32
      %52 = vector.broadcast %c16_i32_30 : i32 to vector<16x1xi32>
      %53 = arith.cmpi slt, %15, %52 : vector<16x1xi32>
      %cst_31 = arith.constant 0.000000e+00 : f32
      %54 = vector.broadcast %cst_31 : f32 to vector<16x1xf32>
      %55 = arith.select %53, %51, %54 : vector<16x1xi1>, vector<16x1xf32>
      %c0_32 = arith.constant 0 : index
      %c0_33 = arith.constant 0 : index
      %56 = vector.load %arg7[%c0_32, %c0_33] : memref<16x1xf32, #tpu.memory_space<vmem>>, vector<16x1xf32>
      tpu.vector_store %arg7[%c0_32, %c0_33], %55 {strides = array<i32>} : memref<16x1xf32, #tpu.memory_space<vmem>>, vector<16x1xf32>,
    } else {
    }
    return
  }
  func.func @transform_0(%arg0: i32, %arg1: i32) -> (i32, i32) {
    %c0_i32 = arith.constant 0 : i32
    %c0_i32_0 = arith.constant 0 : i32
    return %arg0, %c0_i32 : i32, i32
  }
  func.func @transform_1(%arg0: i32, %arg1: i32) -> (i32, i32) {
    %c0_i32 = arith.constant 0 : i32
    %c0_i32_0 = arith.constant 0 : i32
    return %arg1, %c0_i32 : i32, i32
  }
  func.func @transform_2(%arg0: i32, %arg1: i32) -> (i32, i32) {
    %c0_i32 = arith.constant 0 : i32
    %c0_i32_0 = arith.constant 0 : i32
    return %arg0, %c0_i32 : i32, i32
  }
  func.func @transform_3(%arg0: i32, %arg1: i32) -> (i32, i32) {
    %c0_i32 = arith.constant 0 : i32
    %c0_i32_0 = arith.constant 0 : i32
    return %c0_i32, %arg1 : i32, i32
  }
  func.func @transform_4(%arg0: i32, %arg1: i32) -> (i32, i32) {
    %c0_i32 = arith.constant 0 : i32
    %c0_i32_0 = arith.constant 0 : i32
    return %c0_i32, %arg1 : i32, i32
  }
  func.func @transform_5(%arg0: i32, %arg1: i32) -> (i32, i32) {
    %c0_i32 = arith.constant 0 : i32
    %c0_i32_0 = arith.constant 0 : i32
    return %arg0, %c0_i32 : i32, i32
  }
}

</mosaic_0001>

<llo_original>
// kernel: tpu_custom_call.1
$region0: #{tpu_custom_call.1}
  #allocation0 [shape = 'u32[]', space=smem, size = 0x4, offset = 0x4, fixed_abs, tag = 'smem constant byte address 0x4 - core index']
  #allocation1 [shape = 'u32[72,128]{1,0:T(1,128)}', space=vmem, size = 0x9000, scoped, tag = 'internal scratch']
  #allocation2 [shape = 'f32[16,1]{1,0:T(8,128)}', space=vmem, size = 0x2000, scoped, tag = 'scratch operand']
  #allocation3 [shape = 'f32[16,1]{1,0:T(8,128)}', space=vmem, size = 0x2000, scoped, tag = 'scratch operand']
  %s0 = inlined_call_operand.vmem [shape: bf16[16,128], index: 0, kind: input, shape index: {}]
  %s1 = inlined_call_operand.vmem [shape: bf16[16,128], index: 1, kind: input, shape index: {}]
  %s2 = inlined_call_operand.vmem [shape: f32[16,1], index: 2, kind: input, shape index: {}]
  %s3 = inlined_call_operand.vmem [shape: f32[1,16], index: 3, kind: input, shape index: {}]
  %s4 = inlined_call_operand.vmem [shape: f32[1,16], index: 4, kind: input, shape index: {}]
  %s5 = inlined_call_operand.vmem [shape: f32[16,1], index: 5, kind: output, shape index: {}]
  %s6 = sld [smem:[#allocation0]]
  $region38: #{tpu_custom_call.1} parent=0
    _
  %s8 = ssub.s32 1, %s6
  %s9 = scalar_select 0, %s8, %s6
  // Predicated region
  $region2: #{tpu_custom_call.1} parent=0 // pred_check
    _
  $region3: #{tpu_custom_call.1} parent=0 // pred_check_branch
    %11 = sbr.rel (0) target = $region5
  $region4: #{tpu_custom_call.1} parent=0 // pred_region
    _
  $region5: #{tpu_custom_call.1} parent=0 // pred_fallthru
    _
  // Predicated region
  $region6: #{tpu_custom_call.1} parent=0 // pred_check
    _
  $region7: #{tpu_custom_call.1} parent=0 // pred_check_branch
    %13 = sbr.rel (0) target = $region9
  $region8: #{tpu_custom_call.1} parent=0 // pred_region
    _
  $region9: #{tpu_custom_call.1} parent=0 // pred_fallthru
    _
  // Predicated region
  $region10: #{tpu_custom_call.1} parent=0 // pred_check
    _
  $region11: #{tpu_custom_call.1} parent=0 // pred_check_branch
    %15 = sbr.rel (0) target = $region13
  $region12: #{tpu_custom_call.1} parent=0 // pred_region
    _
  $region13: #{tpu_custom_call.1} parent=0 // pred_fallthru
    _
  // Predicated region
  $region14: #{tpu_custom_call.1} parent=0 // pred_check
    _
  $region15: #{tpu_custom_call.1} parent=0 // pred_check_branch
    %17 = sbr.rel (0) target = $region17
  $region16: #{tpu_custom_call.1} parent=0 // pred_region
    _
  $region17: #{tpu_custom_call.1} parent=0 // pred_fallthru
    _
  // Predicated region
  $region18: #{tpu_custom_call.1} parent=0 // pred_check
    _
  $region19: #{tpu_custom_call.1} parent=0 // pred_check_branch
    %19 = sbr.rel (0) target = $region21
  $region20: #{tpu_custom_call.1} parent=0 // pred_region
    _
  $region21: #{tpu_custom_call.1} parent=0 // pred_fallthru
    _
  %p21 = scmp.eq.s32.totalorder 0, 0
  // Predicated region
  $region22: #{tpu_custom_call.1} parent=0 // pred_check
    %p22 = pneg %p21
  $region23: #{tpu_custom_call.1} parent=0 // pred_check_branch
    %24 = sbr.rel (%p22) target = $region25
  $region24: #{tpu_custom_call.1} parent=0 // pred_region
    %vm25 = vcmask 7168
    %26 = vst.msk [vmem:[#allocation2] sm:$0xff] %vm25, -1e+30
    %27 = vst.msk [vmem:[#allocation2 + $0x8] sm:$0xff] %vm25, -1e+30
    %28 = vst.msk [vmem:[#allocation3] sm:$0xff] %vm25, 0.0
    %29 = vst.msk [vmem:[#allocation3 + $0x8] sm:$0xff] %vm25, 0.0
  $region25: #{tpu_custom_call.1} parent=0 // pred_fallthru
    _
  %v30 = vld [vmem:[%s0] sm:$0xf]
  %v31 = vld [vmem:[%s0 + $0x4] sm:$0xf]
  %v32 = vld [vmem:[%s1] sm:$0xf]
  %v33 = vld [vmem:[%s1 + $0x4] sm:$0xf]
  %v36 = vunpack.c.l.b16 %v30
  %v37 = vunpack.c.l.b16 %v31
  %v38 = vpack.c.b16 %v37, %v36
  %v42 = vunpack.c.l.b16 %v32
  %v43 = vunpack.c.l.b16 %v33
  %v44 = vpack.c.b16 %v43, %v42
  %46 = vmatpush.bf16.xpose.msra.mxu0 0
  %47 = vmatpush.bf16.xpose.msra.mxu0 0
  %48 = vmatpush.bf16.xpose.msra.mxu0 0
  %49 = vmatpush.bf16.xpose.msra.mxu0 0
  %50 = vmatpush.bf16.xpose.msra.mxu0 0
  %51 = vmatpush.bf16.xpose.msra.mxu0 0
  %52 = vmatpush.bf16.xpose.msra.mxu0 0
  %53 = vmatpush.bf16.xpose.msra.mxu0 %v44
  %54 = vmatmul.bf16.gmra.mxu0 %v38
  %v55 = vpop.f32.mrf.mxu0
  %v56 = vadd.f32 0.0, %v55
  %v57 = vpop.f32.mrf.mxu0
  %v58 = vadd.f32 0.0, %v57
  %59 = vdwg.mxu0
  %v60 = vld [vmem:[%s2] sm:$0xff]
  %v61 = vld [vmem:[%s2 + $0x8] sm:$0xff]
  %63 = vset.pattern.permute.xlu0 0
  %64 = vperm.xlu0 %63, %v60
  %v65 = vpop.permute.xlu0 %64
  %68 = vset.pattern.permute.xlu0 0
  %69 = vperm.xlu0 %68, %v61
  %v70 = vpop.permute.xlu0 %69
  %v72 = vmul.f32 %v56, %v65
  %v73 = vmul.f32 %v58, %v70
  %v74 = vld [vmem:[%s3] sm:$0x1]
  %v76 = vperm.slane %v74, 0
  %v78 = vmul.f32 %v72, %v76
  %v79 = vmul.f32 %v73, %v76
  %s80 = smul.u32 0, 16
  %v81 = vlaneseq
  %v82 = vshrl.u32 %v81, 7
  %v83 = vadd.s32 %v82, 8
  %v84 = vstv %s80
  %v85 = vadd.s32 %v84, %v82
  %v86 = vadd.s32 %v84, %v83
  %s87 = smul.u32 0, 16
  %v88 = vlaneseq
  %v89 = vand.u32 %v88, 127
  %v90 = vstv %s87
  %v91 = vadd.s32 %v90, %v89
  %vm92 = vcmp.eq.s32.totalorder %v85, %v91
  %vm93 = vcmp.eq.s32.totalorder %v86, %v91
  %v94 = vsel %vm92, -1e+30, %v78
  %v95 = vsel %vm93, -1e+30, %v79
  %v96 = vld [vmem:[%s4] sm:$0x1]
  %v98 = vperm.slane %v96, 0
  %v100 = vadd.f32 %v94, %v98
  %v101 = vadd.f32 %v95, %v98
  %v102 = vld [vmem:[#allocation2] sm:$0xff]
  %v103 = vld [vmem:[#allocation2 + $0x8] sm:$0xff]
  %vm104 = vcmask 130048
  %v105 = vsel %vm104, %v100, -inf
  %106 = vmax.xlane.f32.xlu0 %v105
  %v107 = vpop.xlane.xlu0 %106
  %v108 = vsel %vm104, %v101, -inf
  %109 = vmax.xlane.f32.xlu0 %v108
  %v110 = vpop.xlane.xlu0 %109
  %v111 = vmax.f32 %v102, %v107
  %v112 = vmax.f32 %v103, %v110
  %v113 = vsub.f32 %v102, %v111
  %v114 = vsub.f32 %v103, %v112
  %v115 = vmul.f32 %v113, 1.442695
  %v116 = vpow.pop %v115
  %v117 = vmul.f32 %v114, 1.442695
  %v118 = vpow.pop %v117
  %v119 = vld [vmem:[#allocation3] sm:$0xff]
  %v120 = vld [vmem:[#allocation3 + $0x8] sm:$0xff]
  %v121 = vmul.f32 %v116, %v119
  %v122 = vmul.f32 %v118, %v120
  %124 = vset.pattern.permute.xlu0 0
  %125 = vperm.xlu0 %124, %v111
  %v126 = vpop.permute.xlu0 %125
  %129 = vset.pattern.permute.xlu0 0
  %130 = vperm.xlu0 %129, %v112
  %v131 = vpop.permute.xlu0 %130
  %v133 = vsub.f32 %v100, %v126
  %v134 = vsub.f32 %v101, %v131
  %v135 = vmul.f32 %v133, 1.442695
  %v136 = vpow.pop %v135
  %v137 = vmul.f32 %v134, 1.442695
  %v138 = vpow.pop %v137
  %v139 = vsel %vm104, %v136, 0.0
  %140 = vadd.xlane.f32.xlu0 %v139
  %v141 = vpop.xlane.xlu0 %140
  %v142 = vsel %vm104, %v138, 0.0
  %143 = vadd.xlane.f32.xlu0 %v142
  %v144 = vpop.xlane.xlu0 %143
  %v145 = vadd.f32 %v121, %v141
  %v146 = vadd.f32 %v122, %v144
  %vm147 = vcmask 7168
  %148 = vst.msk [vmem:[#allocation3] sm:$0xff] %vm147, %v145
  %149 = vst.msk [vmem:[#allocation3 + $0x8] sm:$0xff] %vm147, %v146
  %150 = vst.msk [vmem:[#allocation2] sm:$0xff] %vm147, %v111
  %151 = vst.msk [vmem:[#allocation2 + $0x8] sm:$0xff] %vm147, %v112
  // Predicated region
  $region26: #{tpu_custom_call.1} parent=0 // pred_check
    %p152 = pneg %p21
  $region27: #{tpu_custom_call.1} parent=0 // pred_check_branch
    %154 = sbr.rel (%p152) target = $region29
  $region28: #{tpu_custom_call.1} parent=0 // pred_region
    %v155 = vld [vmem:[#allocation2] sm:$0xff]
    %v156 = vld [vmem:[#allocation2 + $0x8] sm:$0xff]
    %v157 = vld [vmem:[#allocation3] sm:$0xff]
    %v158 = vld [vmem:[#allocation3 + $0x8] sm:$0xff]
    %v159 = vlog2.pop %v157
    %v160 = vmul.f32 %v159, 0.6931472
    %v161 = vlog2.pop %v158
    %v162 = vmul.f32 %v161, 0.6931472
    %v163 = vadd.f32 %v155, %v160
    %v164 = vadd.f32 %v156, %v162
    %vm165 = vcmp.lt.s32.totalorder %v85, 16
    %vm166 = vcmp.lt.s32.totalorder %v86, 16
    %v167 = vsel %vm165, %v163, 0.0
    %v168 = vsel %vm166, %v164, 0.0
    %169 = vst.msk [vmem:[%s5] sm:$0xff] %vm147, %v167
    %170 = vst.msk [vmem:[%s5 + $0x8] sm:$0xff] %vm147, %v168
  $region29: #{tpu_custom_call.1} parent=0 // pred_fallthru
    _
  // Predicated region
  $region30: #{tpu_custom_call.1} parent=0 // pred_check
    _
  $region31: #{tpu_custom_call.1} parent=0 // pred_check_branch
    %172 = sbr.rel (0) target = $region33
  $region32: #{tpu_custom_call.1} parent=0 // pred_region
    _
  $region33: #{tpu_custom_call.1} parent=0 // pred_fallthru
    _
  // Predicated region
  $region34: #{tpu_custom_call.1} parent=0 // pred_check
    _
  $region35: #{tpu_custom_call.1} parent=0 // pred_check_branch
    %174 = sbr.rel (0) target = $region37
  $region36: #{tpu_custom_call.1} parent=0 // pred_region
    _
  $region37: #{tpu_custom_call.1} parent=0 // pred_fallthru
    _

</llo_original>
